<compile_context>
chip_gen: v5e
topology: v5e:2x2
jax: 0.10.0
libtpu: 0.0.40
codegen_flags: <defaults>
</compile_context>

<pallas_src>
import functools

import jax
import jax.numpy as jnp
from jax import lax
from jax.experimental import pallas as pl
from jax.experimental.pallas import tpu as pltpu


def _round_up(a, b):
    return (a + b - 1) // b * b


def _device_kind():
    try:
        return jax.devices()[0].device_kind.lower()
    except Exception:
        return ""


def _is_pre_v6(kind=None):
    kind = _device_kind() if kind is None else kind
    return any(t in kind for t in ("v2", "v3", "v4", "v5"))


def _vmem_capacity_bytes():
    try:
        return int(pltpu.get_tpu_info().vmem_capacity_bytes)
    except Exception:
        return 64 * 1024 * 1024   # conservative fallback (v7x-sized)


def _conv_relu_kernel(xa_ref, xh_ref, w_ref, b_ref, o_ref, *,
                      kernel, dilation, l_tile, use_mxu, act_in_f32):
    """One (batch, c_out-block, l-tile) grid step.

    xa_ref: (1, C_in, l_tile)    bf16  main input tile
    xh_ref: (1, C_in, halo_pad)  bf16  halo tile (columns right after xa)
    w_ref : (co_blk, K*C_in)     bf16  weight-normed weights, tap-major cols
    b_ref : (co_blk, 1)          f32   bias
    o_ref : (1, co_blk, l_tile)  out_dtype
    """
    c_in = xa_ref.shape[1]

    # Window = main tile + halo; LeakyReLU(0.1) == max(x, 0.1*x).
    xw = jnp.concatenate([xa_ref[0], xh_ref[0]], axis=-1)
    xact = xw.astype(jnp.float32) if act_in_f32 else xw
    xact = jnp.maximum(xact, 0.1 * xact)
    xw = xact.astype(jnp.bfloat16)

    if use_mxu:
        # im2col: stack the K dilated taps along the contraction dimension and
        # do a single fused MXU matmul with f32 accumulation.
        cols = [xw[:, k * dilation:k * dilation + l_tile] for k in range(kernel)]
        xs = cols[0] if kernel == 1 else jnp.concatenate(cols, axis=0)
        acc = jnp.dot(w_ref[...], xs, preferred_element_type=jnp.float32)
    else:
        # Tiny-contraction fallback: K*C_in broadcast-FMAs on the VPU; the MXU
        # would be mostly padding at these channel counts.
        wf = w_ref[...].astype(jnp.float32)
        acc = jnp.zeros((w_ref.shape[0], l_tile), jnp.float32)
        for k in range(kernel):
            tap = xw[:, k * dilation:k * dilation + l_tile].astype(jnp.float32)
            for ci in range(c_in):
                col = k * c_in + ci
                acc = acc + wf[:, col:col + 1] * tap[ci:ci + 1, :]

    o_ref[0] = (acc + b_ref[...]).astype(o_ref.dtype)


def conv_relu(x, weight_v, weight_g, bias, *, kernel, dilation,
              max_l_tile=None, out_dtype=jnp.float32, force_mxu=None):
    """LeakyReLU(0.1) then weight_norm Conv1d (stride 1,
    padding=(kernel*dilation - dilation)//2), matching the PyTorch module.

    x: (N, C_in, L) f32 -> (N, C_out, L_out) out_dtype.
    """
    n, c_in, length = x.shape
    c_out = weight_v.shape[0]

    pad = (kernel * dilation - dilation) // 2
    halo = (kernel - 1) * dilation
    out_len = length + 2 * pad - halo            # PyTorch output length

    pre_v6 = _is_pre_v6()
    vmem_cap = _vmem_capacity_bytes()
    vmem_limit = int(vmem_cap * 0.75)            # ~48 MiB v7x, ~96 MiB v5e/v6e

    # C_out tiling: MXU-matched block when C_out is large (and divisible).
    co_tile = c_out
    for cand in ((128, 256) if pre_v6 else (256, 128)):
        if c_out > cand and c_out % cand == 0:
            co_tile = cand
            break
    num_co = c_out // co_tile

    # Halo rounded to a full 128-lane block so the halo BlockSpec is
    # lane-aligned (>=128 keeps it valid for kernel == 1 too).
    halo_pad = _round_up(max(halo, 1), 128)

    # Lane tile: largest 128-multiple that (a) divides round_up(out_len, 128)
    # so the padded output adds at most the sub-128 remainder (no large
    # post-kernel slice copy), (b) is a multiple of halo_pad (halo block
    # indexing), and (c) fits the generation's VMEM budget.
    out_len_128 = _round_up(out_len, 128)
    if max_l_tile is None:
        max_l_tile = 2048 if vmem_cap >= 100 * 1024 * 1024 else 1024
    out_itemsize = jnp.dtype(out_dtype).itemsize

    def _vmem_est(lt):
        return (2 * c_in * (lt + halo_pad) * 2        # x main + halo, dbl-buf
                + 2 * co_tile * lt * out_itemsize      # out block, dbl-buf
                + 2 * co_tile * kernel * c_in * 2      # weights
                + 2 * co_tile * 4)                     # bias

    budget = int(vmem_limit * 0.8)
    limit = max(min(_round_up(max_l_tile, 128), out_len_128), halo_pad)
    l_tile = None
    for cand in range(limit, 127, -128):
        if (cand % halo_pad == 0 and out_len_128 % cand == 0
                and _vmem_est(cand) <= budget):
            l_tile = cand
            break
    if l_tile is None:
        l_tile = halo_pad
    out_pad = _round_up(out_len, l_tile)
    num_l = out_pad // l_tile
    x_in_len = out_pad + halo_pad

    # MXU vs VPU dispatch: fall back to broadcast-FMA only for tiny
    # contractions where the systolic array would be mostly padding.
    use_mxu = force_mxu if force_mxu is not None else (kernel * c_in > 32)
    act_in_f32 = pre_v6                               # no bf16 VALUs pre-v6

    # weight_norm: w = g * v / ||v||_2 per output channel (dims 1, 2).
    v32 = weight_v.astype(jnp.float32)
    v_norm = jnp.sqrt(jnp.sum(v32 ** 2, axis=(1, 2), keepdims=True))
    weight = weight_g.astype(jnp.float32) * v32 / v_norm       # (C_out, C_in, K)
    # Tap-major columns matching the in-kernel im2col row order.
    weight2d = jnp.transpose(weight, (0, 2, 1)).reshape(c_out, kernel * c_in)
    weight2d = weight2d.astype(jnp.bfloat16)
    bias2d = bias.reshape(c_out, 1).astype(jnp.float32)

    # Left pad `pad` zeros (leaky_relu(0) == 0 so padding commutes with the
    # in-kernel activation); right pad covers the torch right padding plus the
    # lane-tile / halo alignment.
    x_p = jnp.pad(x, ((0, 0), (0, 0), (pad, x_in_len - length - pad)))
    x_p = x_p.astype(jnp.bfloat16)

    kern = functools.partial(_conv_relu_kernel, kernel=kernel,
                             dilation=dilation, l_tile=l_tile,
                             use_mxu=use_mxu, act_in_f32=act_in_f32)

    flops = 2 * n * c_out * c_in * kernel * out_pad
    bytes_accessed = (num_co * x_p.size * 2
                      + n * num_co * weight2d.size * 2
                      + n * c_out * out_pad * out_itemsize)

    ratio = l_tile // halo_pad

    out_full = pl.pallas_call(
        kern,
        out_shape=jax.ShapeDtypeStruct((n, c_out, out_pad), out_dtype),
        grid_spec=pltpu.PrefetchScalarGridSpec(
            num_scalar_prefetch=0,
            grid=(n, num_co, num_l),
            in_specs=[
                # Main L tile of this batch's padded sample.
                pl.BlockSpec((1, c_in, l_tile), lambda b, co, j: (b, 0, j)),
                # Halo: the 128-rounded lanes right after the main tile.
                pl.BlockSpec((1, c_in, halo_pad),
                             lambda b, co, j: (b, 0, (j + 1) * ratio)),
                # Weights / bias for this C_out block (constant over b, j).
                pl.BlockSpec((co_tile, kernel * c_in), lambda b, co, j: (co, 0)),
                pl.BlockSpec((co_tile, 1), lambda b, co, j: (co, 0)),
            ],
            out_specs=pl.BlockSpec((1, co_tile, l_tile),
                                   lambda b, co, j: (b, co, j)),
        ),
        compiler_params=pltpu.CompilerParams(
            dimension_semantics=("parallel", "parallel", "parallel"),
            vmem_limit_bytes=vmem_limit),
        cost_estimate=pl.CostEstimate(flops=flops, transcendentals=0,
                                      bytes_accessed=bytes_accessed),
    )(x_p, x_p, weight2d, bias2d)

    if out_pad == out_len:
        return out_full
    # l_tile divides round_up(out_len, 128) whenever possible, so this slice
    # trims at most a sub-128 remainder.
    return out_full[:, :, :out_len]


def _reference_f32(x, weight_v, weight_g, bias, *, kernel, dilation):
    # Pure-f32 reference of the original module semantics.
    v_norm = jnp.sqrt(jnp.sum(weight_v ** 2, axis=(1, 2), keepdims=True))
    w = weight_g * weight_v / v_norm
    a = jnp.where(x >= 0, x, 0.1 * x)
    pad = (kernel * dilation - dilation) // 2
    out = lax.conv_general_dilated(
        a, w, window_strides=(1,), padding=[(pad, pad)],
        rhs_dilation=(dilation,), dimension_numbers=("NCH", "OIH", "NCH"))
    return out + bias[None, :, None]


def _reference_bf16(x, weight_v, weight_g, bias, *, kernel, dilation,
                    act_in_f32):
    # Same numerics path as the kernel: bf16 x/weights, f32 accumulation,
    # activation in f32 or bf16 mirroring the kernel's per-generation choice.
    v_norm = jnp.sqrt(jnp.sum(weight_v ** 2, axis=(1, 2), keepdims=True))
    w = (weight_g * weight_v / v_norm).astype(jnp.bfloat16)
    xb = x.astype(jnp.bfloat16)
    xa = xb.astype(jnp.float32) if act_in_f32 else xb
    a = jnp.maximum(xa, 0.1 * xa).astype(jnp.bfloat16)
    pad = (kernel * dilation - dilation) // 2
    out = lax.conv_general_dilated(
        a, w, window_strides=(1,), padding=[(pad, pad)],
        rhs_dilation=(dilation,), dimension_numbers=("NCH", "OIH", "NCH"),
        preferred_element_type=jnp.float32)
    return out + bias[None, :, None].astype(jnp.float32)


if __name__ == "__main__":
    key = jax.random.PRNGKey(0)
    act_in_f32 = _is_pre_v6()

    def _make(case_key, batch, c_in, c_out, length, kernel):
        kx, kv, kg, kb = jax.random.split(case_key, 4)
        x = jax.random.normal(kx, (batch, c_in, length), dtype=jnp.float32)
        wv = jax.random.normal(kv, (c_out, c_in, kernel),
                               dtype=jnp.float32) * 0.5
        wg = jax.random.normal(kg, (c_out, 1, 1), dtype=jnp.float32) * 0.2 + 1.0
        b = jax.random.normal(kb, (c_out,), dtype=jnp.float32) * 0.1
        return x, wv, wg, b

    cases = [
        # (batch, c_in, c_out, length, kernel, dilation, force_mxu)
        (2, 4, 8, 16, 3, 2, None),     # tiny channels -> VPU fallback path
        (2, 4, 8, 16, 3, 2, True),     # same shapes, forced fused-MXU path
        (2, 8, 512, 64, 3, 1, True),   # C_out tiled grid axis, MXU path
    ]

    keys = jax.random.split(key, len(cases))
    for (batch, c_in, c_out, length, kernel, dilation, force_mxu), ck in zip(
            cases, keys):
        x, wv, wg, b = _make(ck, batch, c_in, c_out, length, kernel)
        out = conv_relu(x, wv, wg, b, kernel=kernel, dilation=dilation,
                        force_mxu=force_mxu)
        out = jax.block_until_ready(out)
        assert out.shape == (batch, c_out, length), out.shape

        # Tight check against a reference following the same bf16/f32 path.
        ref_b = _reference_bf16(x, wv, wg, b, kernel=kernel, dilation=dilation,
                                act_in_f32=act_in_f32)
        assert jnp.allclose(out, ref_b, atol=3e-3, rtol=3e-3)

        # Loose check against the true f32 module semantics (bf16 quantization).
        ref_f = _reference_f32(x, wv, wg, b, kernel=kernel, dilation=dilation)
        assert jnp.allclose(out, ref_f, atol=1e-1, rtol=1e-1)

    print("KERNEL_OK")
</pallas_src>

<mosaic_0001>
module attributes {stable_mosaic.version = 11 : i64} {
  func.func @_conv_relu_kernel(%arg0: i32, %arg1: i32, %arg2: i32, %arg3: memref<1x4x128xbf16, #tpu.memory_space<vmem>>, %arg4: memref<1x4x128xbf16, #tpu.memory_space<vmem>>, %arg5: memref<8x12xbf16, #tpu.memory_space<vmem>>, %arg6: memref<8x1xf32, #tpu.memory_space<vmem>>, %arg7: memref<1x8x128xf32, #tpu.memory_space<vmem>>) attributes {dimension_semantics = [#tpu.dimension_semantics<parallel>, #tpu.dimension_semantics<parallel>, #tpu.dimension_semantics<parallel>], iteration_bounds = array<i64: 2, 1, 1>, scalar_prefetch = 0 : i64, scratch_operands = 0 : i64, tpu.core_type = #tpu.core_type<tc>, window_params = [{transform_indices = @transform_0, window_bounds = array<i64: 1, 4, 128>}, {transform_indices = @transform_1, window_bounds = array<i64: 1, 4, 128>}, {transform_indices = @transform_2, window_bounds = array<i64: 8, 12>}, {transform_indices = @transform_3, window_bounds = array<i64: 8, 1>}, {transform_indices = @transform_4, window_bounds = array<i64: 1, 8, 128>}]} {
    %c0 = arith.constant 0 : index
    %c0_0 = arith.constant 0 : index
    %c0_1 = arith.constant 0 : index
    %0 = vector.load %arg3[%c0, %c0_0, %c0_1] : memref<1x4x128xbf16, #tpu.memory_space<vmem>>, vector<1x4x128xbf16>
    %1 = vector.shape_cast %0 : vector<1x4x128xbf16> to vector<4x128xbf16>
    %c0_2 = arith.constant 0 : index
    %c0_3 = arith.constant 0 : index
    %c0_4 = arith.constant 0 : index
    %2 = vector.load %arg4[%c0_2, %c0_3, %c0_4] : memref<1x4x128xbf16, #tpu.memory_space<vmem>>, vector<1x4x128xbf16>
    %3 = vector.shape_cast %2 : vector<1x4x128xbf16> to vector<4x128xbf16>
    %4 = tpu.concatenate %1, %3 in 1 : vector<4x128xbf16>, vector<4x128xbf16> -> vector<4x256xbf16>
    %cst = arith.constant 1.000980e-01 : bf16
    %5 = vector.broadcast %cst : bf16 to vector<4x256xbf16>
    %6 = arith.mulf %5, %4 : vector<4x256xbf16>
    %7 = arith.maximumf %4, %6 : vector<4x256xbf16>
    %c0_5 = arith.constant 0 : index
    %c0_6 = arith.constant 0 : index
    %8 = vector.load %arg5[%c0_5, %c0_6] : memref<8x12xbf16, #tpu.memory_space<vmem>>, vector<8x12xbf16>
    %9 = arith.extf %8 : vector<8x12xbf16> to vector<8x12xf32>
    %cst_7 = arith.constant 0.000000e+00 : f32
    %10 = vector.broadcast %cst_7 : f32 to vector<8x128xf32>
    %11 = vector.extract_strided_slice %7 {offsets = [0, 0], sizes = [4, 128], strides = [1, 1]} : vector<4x256xbf16> to vector<4x128xbf16>
    %12 = arith.extf %11 : vector<4x128xbf16> to vector<4x128xf32>
    %13 = vector.extract_strided_slice %9 {offsets = [0, 0], sizes = [8, 1], strides = [1, 1]} : vector<8x12xf32> to vector<8x1xf32>
    %14 = vector.extract_strided_slice %12 {offsets = [0, 0], sizes = [1, 128], strides = [1, 1]} : vector<4x128xf32> to vector<1x128xf32>
    %15 = vector.broadcast %13 : vector<8x1xf32> to vector<8x128xf32>
    %16 = vector.broadcast %14 : vector<1x128xf32> to vector<8x128xf32>
    %17 = arith.mulf %15, %16 : vector<8x128xf32>
    %18 = arith.addf %10, %17 : vector<8x128xf32>
    %19 = vector.extract_strided_slice %9 {offsets = [0, 1], sizes = [8, 1], strides = [1, 1]} : vector<8x12xf32> to vector<8x1xf32>
    %20 = vector.extract_strided_slice %12 {offsets = [1, 0], sizes = [1, 128], strides = [1, 1]} : vector<4x128xf32> to vector<1x128xf32>
    %21 = vector.broadcast %19 : vector<8x1xf32> to vector<8x128xf32>
    %22 = vector.broadcast %20 : vector<1x128xf32> to vector<8x128xf32>
    %23 = arith.mulf %21, %22 : vector<8x128xf32>
    %24 = arith.addf %18, %23 : vector<8x128xf32>
    %25 = vector.extract_strided_slice %9 {offsets = [0, 2], sizes = [8, 1], strides = [1, 1]} : vector<8x12xf32> to vector<8x1xf32>
    %26 = vector.extract_strided_slice %12 {offsets = [2, 0], sizes = [1, 128], strides = [1, 1]} : vector<4x128xf32> to vector<1x128xf32>
    %27 = vector.broadcast %25 : vector<8x1xf32> to vector<8x128xf32>
    %28 = vector.broadcast %26 : vector<1x128xf32> to vector<8x128xf32>
    %29 = arith.mulf %27, %28 : vector<8x128xf32>
    %30 = arith.addf %24, %29 : vector<8x128xf32>
    %31 = vector.extract_strided_slice %9 {offsets = [0, 3], sizes = [8, 1], strides = [1, 1]} : vector<8x12xf32> to vector<8x1xf32>
    %32 = vector.extract_strided_slice %12 {offsets = [3, 0], sizes = [1, 128], strides = [1, 1]} : vector<4x128xf32> to vector<1x128xf32>
    %33 = vector.broadcast %31 : vector<8x1xf32> to vector<8x128xf32>
    %34 = vector.broadcast %32 : vector<1x128xf32> to vector<8x128xf32>
    %35 = arith.mulf %33, %34 : vector<8x128xf32>
    %36 = arith.addf %30, %35 : vector<8x128xf32>
    %37 = vector.extract_strided_slice %7 {offsets = [0, 2], sizes = [4, 128], strides = [1, 1]} : vector<4x256xbf16> to vector<4x128xbf16>
    %38 = arith.extf %37 : vector<4x128xbf16> to vector<4x128xf32>
    %39 = vector.extract_strided_slice %9 {offsets = [0, 4], sizes = [8, 1], strides = [1, 1]} : vector<8x12xf32> to vector<8x1xf32>
    %40 = vector.extract_strided_slice %38 {offsets = [0, 0], sizes = [1, 128], strides = [1, 1]} : vector<4x128xf32> to vector<1x128xf32>
    %41 = vector.broadcast %39 : vector<8x1xf32> to vector<8x128xf32>
    %42 = vector.broadcast %40 : vector<1x128xf32> to vector<8x128xf32>
    %43 = arith.mulf %41, %42 : vector<8x128xf32>
    %44 = arith.addf %36, %43 : vector<8x128xf32>
    %45 = vector.extract_strided_slice %9 {offsets = [0, 5], sizes = [8, 1], strides = [1, 1]} : vector<8x12xf32> to vector<8x1xf32>
    %46 = vector.extract_strided_slice %38 {offsets = [1, 0], sizes = [1, 128], strides = [1, 1]} : vector<4x128xf32> to vector<1x128xf32>
    %47 = vector.broadcast %45 : vector<8x1xf32> to vector<8x128xf32>
    %48 = vector.broadcast %46 : vector<1x128xf32> to vector<8x128xf32>
    %49 = arith.mulf %47, %48 : vector<8x128xf32>
    %50 = arith.addf %44, %49 : vector<8x128xf32>
    %51 = vector.extract_strided_slice %9 {offsets = [0, 6], sizes = [8, 1], strides = [1, 1]} : vector<8x12xf32> to vector<8x1xf32>
    %52 = vector.extract_strided_slice %38 {offsets = [2, 0], sizes = [1, 128], strides = [1, 1]} : vector<4x128xf32> to vector<1x128xf32>
    %53 = vector.broadcast %51 : vector<8x1xf32> to vector<8x128xf32>
    %54 = vector.broadcast %52 : vector<1x128xf32> to vector<8x128xf32>
    %55 = arith.mulf %53, %54 : vector<8x128xf32>
    %56 = arith.addf %50, %55 : vector<8x128xf32>
    %57 = vector.extract_strided_slice %9 {offsets = [0, 7], sizes = [8, 1], strides = [1, 1]} : vector<8x12xf32> to vector<8x1xf32>
    %58 = vector.extract_strided_slice %38 {offsets = [3, 0], sizes = [1, 128], strides = [1, 1]} : vector<4x128xf32> to vector<1x128xf32>
    %59 = vector.broadcast %57 : vector<8x1xf32> to vector<8x128xf32>
    %60 = vector.broadcast %58 : vector<1x128xf32> to vector<8x128xf32>
    %61 = arith.mulf %59, %60 : vector<8x128xf32>
    %62 = arith.addf %56, %61 : vector<8x128xf32>
    %63 = vector.extract_strided_slice %7 {offsets = [0, 4], sizes = [4, 128], strides = [1, 1]} : vector<4x256xbf16> to vector<4x128xbf16>
    %64 = arith.extf %63 : vector<4x128xbf16> to vector<4x128xf32>
    %65 = vector.extract_strided_slice %9 {offsets = [0, 8], sizes = [8, 1], strides = [1, 1]} : vector<8x12xf32> to vector<8x1xf32>
    %66 = vector.extract_strided_slice %64 {offsets = [0, 0], sizes = [1, 128], strides = [1, 1]} : vector<4x128xf32> to vector<1x128xf32>
    %67 = vector.broadcast %65 : vector<8x1xf32> to vector<8x128xf32>
    %68 = vector.broadcast %66 : vector<1x128xf32> to vector<8x128xf32>
    %69 = arith.mulf %67, %68 : vector<8x128xf32>
    %70 = arith.addf %62, %69 : vector<8x128xf32>
    %71 = vector.extract_strided_slice %9 {offsets = [0, 9], sizes = [8, 1], strides = [1, 1]} : vector<8x12xf32> to vector<8x1xf32>
    %72 = vector.extract_strided_slice %64 {offsets = [1, 0], sizes = [1, 128], strides = [1, 1]} : vector<4x128xf32> to vector<1x128xf32>
    %73 = vector.broadcast %71 : vector<8x1xf32> to vector<8x128xf32>
    %74 = vector.broadcast %72 : vector<1x128xf32> to vector<8x128xf32>
    %75 = arith.mulf %73, %74 : vector<8x128xf32>
    %76 = arith.addf %70, %75 : vector<8x128xf32>
    %77 = vector.extract_strided_slice %9 {offsets = [0, 10], sizes = [8, 1], strides = [1, 1]} : vector<8x12xf32> to vector<8x1xf32>
    %78 = vector.extract_strided_slice %64 {offsets = [2, 0], sizes = [1, 128], strides = [1, 1]} : vector<4x128xf32> to vector<1x128xf32>
    %79 = vector.broadcast %77 : vector<8x1xf32> to vector<8x128xf32>
    %80 = vector.broadcast %78 : vector<1x128xf32> to vector<8x128xf32>
    %81 = arith.mulf %79, %80 : vector<8x128xf32>
    %82 = arith.addf %76, %81 : vector<8x128xf32>
    %83 = vector.extract_strided_slice %9 {offsets = [0, 11], sizes = [8, 1], strides = [1, 1]} : vector<8x12xf32> to vector<8x1xf32>
    %84 = vector.extract_strided_slice %64 {offsets = [3, 0], sizes = [1, 128], strides = [1, 1]} : vector<4x128xf32> to vector<1x128xf32>
    %85 = vector.broadcast %83 : vector<8x1xf32> to vector<8x128xf32>
    %86 = vector.broadcast %84 : vector<1x128xf32> to vector<8x128xf32>
    %87 = arith.mulf %85, %86 : vector<8x128xf32>
    %88 = arith.addf %82, %87 : vector<8x128xf32>
    %c0_8 = arith.constant 0 : index
    %c0_9 = arith.constant 0 : index
    %89 = vector.load %arg6[%c0_8, %c0_9] : memref<8x1xf32, #tpu.memory_space<vmem>>, vector<8x1xf32>
    %90 = vector.broadcast %89 : vector<8x1xf32> to vector<8x128xf32>
    %91 = arith.addf %88, %90 : vector<8x128xf32>
    %c0_10 = arith.constant 0 : index
    %c0_11 = arith.constant 0 : index
    %c0_12 = arith.constant 0 : index
    %92 = vector.load %arg7[%c0_10, %c0_11, %c0_12] : memref<1x8x128xf32, #tpu.memory_space<vmem>>, vector<1x8x128xf32>
    %93 = vector.shape_cast %92 : vector<1x8x128xf32> to vector<8x128xf32>
    %94 = vector.shape_cast %91 : vector<8x128xf32> to vector<1x8x128xf32>
    tpu.vector_store %arg7[%c0_10, %c0_11, %c0_12], %94 {strides = array<i32>} : memref<1x8x128xf32, #tpu.memory_space<vmem>>, vector<1x8x128xf32>,
    return
  }
  func.func @transform_0(%arg0: i32, %arg1: i32, %arg2: i32) -> (i32, i32, i32) {
    %c0_i32 = arith.constant 0 : i32
    %c0_i32_0 = arith.constant 0 : i32
    return %arg0, %c0_i32, %arg2 : i32, i32, i32
  }
  func.func @transform_1(%arg0: i32, %arg1: i32, %arg2: i32) -> (i32, i32, i32) {
    %c1_i32 = arith.constant 1 : i32
    %0 = arith.addi %arg2, %c1_i32 : i32
    %c1_i32_0 = arith.constant 1 : i32
    %1 = arith.muli %0, %c1_i32_0 : i32
    %c0_i32 = arith.constant 0 : i32
    %c0_i32_1 = arith.constant 0 : i32
    return %arg0, %c0_i32, %1 : i32, i32, i32
  }
  func.func @transform_2(%arg0: i32, %arg1: i32, %arg2: i32) -> (i32, i32) {
    %c0_i32 = arith.constant 0 : i32
    %c0_i32_0 = arith.constant 0 : i32
    return %arg1, %c0_i32 : i32, i32
  }
  func.func @transform_3(%arg0: i32, %arg1: i32, %arg2: i32) -> (i32, i32) {
    %c0_i32 = arith.constant 0 : i32
    %c0_i32_0 = arith.constant 0 : i32
    return %arg1, %c0_i32 : i32, i32
  }
  func.func @transform_4(%arg0: i32, %arg1: i32, %arg2: i32) -> (i32, i32, i32) {
    %c0_i32 = arith.constant 0 : i32
    return %arg0, %arg1, %arg2 : i32, i32, i32
  }
}

</mosaic_0001>

<llo_original>
// kernel: tpu_custom_call.1
$region0: #{tpu_custom_call.1}
  #allocation0 [shape = 'u32[]', space=smem, size = 0x4, offset = 0x4, fixed_abs, tag = 'smem constant byte address 0x4 - core index']
  #allocation1 [shape = 'u32[72,128]{1,0:T(1,128)}', space=vmem, size = 0x9000, scoped, tag = 'internal scratch']
  %s0 = inlined_call_operand.vmem [shape: bf16[2,4,256], index: 0, kind: input, shape index: {}]
  %s1 = inlined_call_operand.hbm [shape: bf16[2,4,256], index: 1, kind: input, shape index: {}]
  %s2 = inlined_call_operand.hbm [shape: bf16[8,12], index: 2, kind: input, shape index: {}]
  %s3 = inlined_call_operand.vmem [shape: f32[8,1], index: 3, kind: input, shape index: {}]
  %s4 = inlined_call_operand.hbm [shape: f32[2,8,128], index: 4, kind: output, shape index: {}]
  %s5 = sld [smem:[#allocation0]]
  $region57: #{tpu_custom_call.1} parent=0
    _
  %s7 = ssub.s32 1, %s5
  %s8 = scalar_select 0, %s7, %s5
  $region1: #{tpu_custom_call.1} parent=0
    #allocation2 [shape = 'u8[2048]{0}', space=vmem, size = 0x800, scoped, tag = 'input window, operand 1']
    #allocation3 [shape = 's32[2]{0}', space=sflag, size = 0x8, scoped, tag = 'scoped memory for tpu_custom_call.1']
    #allocation4 [shape = 's32[2]{0}', space=sflag, size = 0x8, scoped, tag = 'scoped memory for tpu_custom_call.1']
    #allocation5 [shape = 'u8[2048]{0}', space=vmem, size = 0x800, scoped, tag = 'input window, operand 2, single buffered']
    #allocation6 [shape = 's32[1]{0}', space=sflag, size = 0x4, scoped, tag = 'scoped memory for tpu_custom_call.1']
    #allocation7 [shape = 'u8[8192]{0}', space=vmem, size = 0x2000, scoped, tag = 'output window, operand 0']
    %9 = vsyncpa [#allocation3], 0
    %s10 = scalar_lea.sflag [#allocation3], 1
    %11 = vsyncpa %s10, 0
    %12 = vsyncpa [#allocation6], 0
    %13 = vsyncpa [#allocation4], 0
    %s14 = scalar_lea.sflag [#allocation4], 1
    %15 = vsyncpa %s14, 0
    loop: start=0, step=1, limit=4
    $region2: #{tpu_custom_call.1} parent=1 // loop_pre_header
      _
    $region3: #{tpu_custom_call.1} parent=1 // loop_header
      %s17 = sphi 0, %s21
      %p18 = scmp.ge.s32.totalorder %s17, 4
      %s24 = sphi 0, %s43
      %s25 = sphi 0, %s39
      %s26 = sphi 0, %s35
      %s27 = sphi 0, %s24
      %s28 = sphi 0, %s25
      %s29 = sphi 0, %s26
      %s30 = sphi 0, %s27
      %s31 = sphi 0, %s28
      %s32 = sphi 0, %s29
      %s48 = sphi 0, %s50
      %s51 = sphi 0, %s48
      %s52 = sphi 0, %s51
      %s68 = sphi 0, %s52
      %s78 = sphi 0, %s80
      %s81 = sphi 0, %s78
      %s82 = sphi 0, %s81
      %s98 = sphi 0, %s82
      %s104 = sphi 0, %s106
      %s107 = sphi 0, %s104
      %s108 = sphi 0, %s107
      %s124 = sphi 0, %s108
      %s130 = sphi 0, %s132
      %s133 = sphi 0, %s130
      %s134 = sphi 0, %s133
      %s150 = sphi 0, %s134
      %s160 = sphi 0, %s162
      %s163 = sphi 0, %s160
      %s164 = sphi 0, %s163
      %s180 = sphi 0, %s164
    $region4: #{tpu_custom_call.1} parent=1 // loop_header_branch
      %20 = sbr.rel (%p18) target = $region8
    $region5: #{tpu_custom_call.1} parent=1 // loop_body
      %s22 = ssub.s32 %s17, 1
      %s23 = ssub.s32 %s17, 2
      %s33 = sadd.s32 1, %s26
      %p34 = scmp.ge.s32.totalorder %s33, 1
      %s35 = scalar_select %p34, 0, %s33
      %s36 = sadd.s32 1, %s25
      %s37 = scalar_select %p34, %s36, %s25
      %p38 = scmp.ge.s32.totalorder %s37, 1
      %s39 = scalar_select %p38, 0, %s37
      %s40 = sadd.s32 1, %s24
      %s41 = scalar_select %p38, %s40, %s24
      %p42 = scmp.ge.s32.totalorder %s41, 2
      %s43 = scalar_select %p42, 0, %s41
      %s44 = ssub.s32 %s24, %s43
      %s45 = ssub.s32 %s26, %s35
      %s46 = sor.u32 %s44, %s45
      %p47 = scmp.eq.s32.totalorder %s46, 0
      %s49 = sadd.s32 %s48, 1
      %s50 = scalar_select %p47, %s48, %s49
      %p53 = pneg %p47
      %p54 = scmp.eq.s32.totalorder %s17, 1
      %p55 = por %p53, %p54
      %p56 = scmp.ne.s32.totalorder %s48, %s51
      %p57 = scmp.eq.s32.totalorder %s17, 0
      %p58 = por %p56, %p57
      %p59 = scmp.ne.s32.totalorder %s48, %s51
      %p60 = scmp.eq.s32.totalorder %s22, 1
      %p61 = por %p59, %p60
      %p62 = scmp.ne.s32.totalorder %s51, %s52
      %p63 = scmp.eq.s32.totalorder %s22, 0
      %p64 = por %p62, %p63
      %p65 = scmp.ne.s32.totalorder %s51, %s52
      %p66 = scmp.eq.s32.totalorder %s23, 1
      %p67 = por %p65, %p66
      %p69 = scmp.ne.s32.totalorder %s52, %s68
      %p70 = scmp.eq.s32.totalorder %s23, 0
      %p71 = por %p69, %p70
      %s72 = sadd.s32 %s26, 1
      %s73 = sadd.s32 %s35, 1
      %s74 = ssub.s32 %s24, %s43
      %s75 = ssub.s32 %s72, %s73
      %s76 = sor.u32 %s74, %s75
      %p77 = scmp.eq.s32.totalorder %s76, 0
      %s79 = sadd.s32 %s78, 1
      %s80 = scalar_select %p77, %s78, %s79
      %p83 = pneg %p77
      %p84 = scmp.eq.s32.totalorder %s17, 1
      %p85 = por %p83, %p84
      %p86 = scmp.ne.s32.totalorder %s78, %s81
      %p87 = scmp.eq.s32.totalorder %s17, 0
      %p88 = por %p86, %p87
      %p89 = scmp.ne.s32.totalorder %s78, %s81
      %p90 = scmp.eq.s32.totalorder %s22, 1
      %p91 = por %p89, %p90
      %p92 = scmp.ne.s32.totalorder %s81, %s82
      %p93 = scmp.eq.s32.totalorder %s22, 0
      %p94 = por %p92, %p93
      %p95 = scmp.ne.s32.totalorder %s81, %s82
      %p96 = scmp.eq.s32.totalorder %s23, 1
      %p97 = por %p95, %p96
      %p99 = scmp.ne.s32.totalorder %s82, %s98
      %p100 = scmp.eq.s32.totalorder %s23, 0
      %p101 = por %p99, %p100
      %s102 = ssub.s32 %s25, %s39
      %p103 = scmp.eq.s32.totalorder %s102, 0
      %s105 = sadd.s32 %s104, 1
      %s106 = scalar_select %p103, %s104, %s105
      %p109 = pneg %p103
      %p110 = scmp.eq.s32.totalorder %s17, 1
      %p111 = por %p109, %p110
      %p112 = scmp.ne.s32.totalorder %s104, %s107
      %p113 = scmp.eq.s32.totalorder %s17, 0
      %p114 = por %p112, %p113
      %p115 = scmp.ne.s32.totalorder %s104, %s107
      %p116 = scmp.eq.s32.totalorder %s22, 1
      %p117 = por %p115, %p116
      %p118 = scmp.ne.s32.totalorder %s107, %s108
      %p119 = scmp.eq.s32.totalorder %s22, 0
      %p120 = por %p118, %p119
      %p121 = scmp.ne.s32.totalorder %s107, %s108
      %p122 = scmp.eq.s32.totalorder %s23, 1
      %p123 = por %p121, %p122
      %p125 = scmp.ne.s32.totalorder %s108, %s124
      %p126 = scmp.eq.s32.totalorder %s23, 0
      %p127 = por %p125, %p126
      %s128 = ssub.s32 %s25, %s39
      %p129 = scmp.eq.s32.totalorder %s128, 0
      %s131 = sadd.s32 %s130, 1
      %s132 = scalar_select %p129, %s130, %s131
      %p135 = pneg %p129
      %p136 = scmp.eq.s32.totalorder %s17, 1
      %p137 = por %p135, %p136
      %p138 = scmp.ne.s32.totalorder %s130, %s133
      %p139 = scmp.eq.s32.totalorder %s17, 0
      %p140 = por %p138, %p139
      %p141 = scmp.ne.s32.totalorder %s130, %s133
      %p142 = scmp.eq.s32.totalorder %s22, 1
      %p143 = por %p141, %p142
      %p144 = scmp.ne.s32.totalorder %s133, %s134
      %p145 = scmp.eq.s32.totalorder %s22, 0
      %p146 = por %p144, %p145
      %p147 = scmp.ne.s32.totalorder %s133, %s134
      %p148 = scmp.eq.s32.totalorder %s23, 1
      %p149 = por %p147, %p148
      %p151 = scmp.ne.s32.totalorder %s134, %s150
      %p152 = scmp.eq.s32.totalorder %s23, 0
      %p153 = por %p151, %p152
      %s154 = ssub.s32 %s24, %s43
      %s155 = ssub.s32 %s25, %s39
      %s156 = sor.u32 %s154, %s155
      %s157 = ssub.s32 %s26, %s35
      %s158 = sor.u32 %s156, %s157
      %p159 = scmp.eq.s32.totalorder %s158, 0
      %s161 = sadd.s32 %s160, 1
      %s162 = scalar_select %p159, %s160, %s161
      %p165 = pneg %p159
      %p166 = scmp.eq.s32.totalorder %s17, 1
      %p167 = por %p165, %p166
      %p168 = scmp.ne.s32.totalorder %s160, %s163
      %p169 = scmp.eq.s32.totalorder %s17, 0
      %p170 = por %p168, %p169
      %p171 = scmp.ne.s32.totalorder %s160, %s163
      %p172 = scmp.eq.s32.totalorder %s22, 1
      %p173 = por %p171, %p172
      %p174 = scmp.ne.s32.totalorder %s163, %s164
      %p175 = scmp.eq.s32.totalorder %s22, 0
      %p176 = por %p174, %p175
      %p177 = scmp.ne.s32.totalorder %s163, %s164
      %p178 = scmp.eq.s32.totalorder %s23, 1
      %p179 = por %p177, %p178
      %p181 = scmp.ne.s32.totalorder %s164, %s180
      %p182 = scmp.eq.s32.totalorder %s23, 0
      %p183 = por %p181, %p182
      %p184 = scmp.le.s32.totalorder 1, %s17
      %p185 = scmp.lt.s32.totalorder %s17, 3
      %p186 = pnand %p184, %p185
      %p187 = pneg %p186
      // Predicated region
      $region9: #{tpu_custom_call.1} parent=5 // pred_check
        _
      $region10: #{tpu_custom_call.1} parent=5 // pred_check_branch
        %189 = sbr.rel (%p186) target = $region12
      $region11: #{tpu_custom_call.1} parent=5 // pred_region
        %s190 = ssub.s32 %s17, 1
        // Predicated region
        $region13: #{tpu_custom_call.1} parent=11 // pred_check
          %p191 = pneg %p120
        $region14: #{tpu_custom_call.1} parent=11 // pred_check_branch
          %193 = sbr.rel (%p191) target = $region16
        $region15: #{tpu_custom_call.1} parent=11 // pred_region
          %195 = vsyncadd [#allocation6], 0
          %s196 = smul.addr %s28, 4
          %s197 = scalar_lea.hbm %s2, %s196
          %s199 = sshll.u32 %s197, 4
          %s200 = int_to_ptr.hbm [resolvable:$true] %s199
          %s201 = sshll.u32 [#allocation5], 4
          %s202 = int_to_ptr.vmem [resolvable:$true] %s201
          %204 = dma.hbm_to_vmem [thread:$0]  %s200, 64, %s202, [#allocation6]
        $region16: #{tpu_custom_call.1} parent=11 // pred_fallthru
          _
        // Predicated region
        $region17: #{tpu_custom_call.1} parent=11 // pred_check
          %p205 = pneg %p146
        $region18: #{tpu_custom_call.1} parent=11 // pred_check_branch
          %207 = sbr.rel (%p205) target = $region20
        $region19: #{tpu_custom_call.1} parent=11 // pred_region
          %p208 = scmp.lt.s32.totalorder %s28, 0
          %s209 = scalar_select %p208, %s28, 0
          %s210 = smul.addr %s209, 8
          %s211 = scalar_lea.vmem %s3, %s210
        $region20: #{tpu_custom_call.1} parent=11 // pred_fallthru
          _
      $region12: #{tpu_custom_call.1} parent=5 // pred_fallthru
        _
      %p212 = scmp.lt.s32.totalorder %s17, 2
      // Predicated region
      $region21: #{tpu_custom_call.1} parent=5 // pred_check
        %p213 = pneg %p212
      $region22: #{tpu_custom_call.1} parent=5 // pred_check_branch
        %215 = sbr.rel (%p213) target = $region24
      $region23: #{tpu_custom_call.1} parent=5 // pred_region
        // Predicated region
        $region25: #{tpu_custom_call.1} parent=23 // pred_check
          %p216 = pneg %p58
        $region26: #{tpu_custom_call.1} parent=23 // pred_check_branch
          %218 = sbr.rel (%p216) target = $region28
        $region27: #{tpu_custom_call.1} parent=23 // pred_region
          %p219 = scmp.lt.s32.totalorder %s24, 1
          %s220 = scalar_select %p219, %s24, 1
          %p221 = scmp.lt.s32.totalorder %s26, 1
          %s222 = scalar_select %p221, %s26, 1
          %s223 = smul.addr %s220, 2
          %s224 = sadd.s32 %s222, %s223
          %s225 = smul.addr %s224, 2
          %s226 = scalar_lea.vmem %s0, %s225
        $region28: #{tpu_custom_call.1} parent=23 // pred_fallthru
          _
        // Predicated region
        $region29: #{tpu_custom_call.1} parent=23 // pred_check
          %p227 = pneg %p88
        $region30: #{tpu_custom_call.1} parent=23 // pred_check_branch
          %229 = sbr.rel (%p227) target = $region32
        $region31: #{tpu_custom_call.1} parent=23 // pred_region
          %s230 = sand.u32 %s78, 1
          %s231 = scalar_lea.sflag [#allocation3], %s230
          %s232 = sand.u32 %s78, 1
          %s233 = smul.addr %s232, 2
          %s234 = scalar_lea.vmem [#allocation2], %s233
          %s235 = sadd.s32 %s26, 1
          %237 = vsyncadd %s231, 0
          %s238 = smul.addr %s24, 2
          %s239 = sadd.s32 %s235, %s238
          %s240 = smul.addr %s239, 2
          %s241 = scalar_lea.hbm %s1, %s240
          %s243 = sshll.u32 %s241, 4
          %s244 = int_to_ptr.hbm [resolvable:$true] %s243
          %s245 = sshll.u32 %s234, 4
          %s246 = int_to_ptr.vmem [resolvable:$true] %s245
          %248 = dma.hbm_to_vmem [thread:$0]  %s244, 32, %s246, %s231
        $region32: #{tpu_custom_call.1} parent=23 // pred_fallthru
          _
      $region24: #{tpu_custom_call.1} parent=5 // pred_fallthru
        _
      %p249 = scmp.le.s32.totalorder 1, %s17
      %p250 = scmp.lt.s32.totalorder %s17, 3
      %p251 = pnand %p249, %p250
      %p252 = pneg %p251
      // Predicated region
      $region33: #{tpu_custom_call.1} parent=5 // pred_check
        _
      $region34: #{tpu_custom_call.1} parent=5 // pred_check_branch
        %254 = sbr.rel (%p251) target = $region36
      $region35: #{tpu_custom_call.1} parent=5 // pred_region
        %s255 = ssub.s32 %s17, 1
        %s256 = sand.u32 %s81, 1
        %s257 = scalar_lea.sflag [#allocation3], %s256
        %s258 = sand.u32 %s81, 1
        %s259 = smul.addr %s258, 2
        %s260 = scalar_lea.vmem [#allocation2], %s259
        // Predicated region
        $region37: #{tpu_custom_call.1} parent=35 // pred_check
          %p261 = pneg %p94
        $region38: #{tpu_custom_call.1} parent=35 // pred_check_branch
          %263 = sbr.rel (%p261) target = $region40
        $region39: #{tpu_custom_call.1} parent=35 // pred_region
          %265 = dma.done %s257, 32
        $region40: #{tpu_custom_call.1} parent=35 // pred_fallthru
          _
        // Predicated region
        $region41: #{tpu_custom_call.1} parent=35 // pred_check
          %p266 = pneg %p120
        $region42: #{tpu_custom_call.1} parent=35 // pred_check_branch
          %268 = sbr.rel (%p266) target = $region44
        $region43: #{tpu_custom_call.1} parent=35 // pred_region
          %270 = dma.done [#allocation6], 64
        $region44: #{tpu_custom_call.1} parent=35 // pred_fallthru
          _
        %p271 = scmp.lt.s32.totalorder %s27, 1
        %s272 = scalar_select %p271, %s27, 1
        %p273 = scmp.lt.s32.totalorder %s29, 1
        %s274 = scalar_select %p273, %s29, 1
        %s275 = smul.addr %s272, 2
        %s276 = sadd.s32 %s274, %s275
        %s277 = smul.addr %s276, 2
        %s278 = scalar_lea.vmem %s0, %s277
        %p279 = pneg %p64
        %p280 = pneg %p61
        %s281 = sand.u32 %s81, 1
        %s282 = scalar_lea.sflag [#allocation3], %s281
        %s283 = sand.u32 %s81, 1
        %s284 = smul.addr %s283, 2
        %s285 = scalar_lea.vmem [#allocation2], %s284
        %p286 = pneg %p94
        %p287 = pneg %p91
        %p288 = pneg %p120
        %p289 = pneg %p117
        %p290 = scmp.lt.s32.totalorder %s28, 0
        %s291 = scalar_select %p290, %s28, 0
        %s292 = smul.addr %s291, 8
        %s293 = scalar_lea.vmem %s3, %s292
        %p294 = pneg %p146
        %p295 = pneg %p143
        %p296 = pneg %p176
        %p297 = pneg %p173
        %s298 = sand.u32 %s163, 1
        %s299 = scalar_lea.sflag [#allocation4], %s298
        %s300 = sand.u32 %s163, 1
        %s301 = smul.addr %s300, 8
        %s302 = scalar_lea.vmem [#allocation7], %s301
        %p303 = scmp.lt.s32.totalorder %s27, 1
        %s304 = scalar_select %p303, %s27, 1
        %p305 = scmp.lt.s32.totalorder %s29, 1
        %s306 = scalar_select %p305, %s29, 1
        %s307 = smul.addr %s304, 2
        %s308 = sadd.s32 %s306, %s307
        %s309 = smul.addr %s308, 2
        %s310 = scalar_lea.vmem %s0, %s309
        %s311 = sadd.s32 %s29, 1
        %p312 = scmp.lt.s32.totalorder %s28, 0
        %s313 = scalar_select %p312, %s28, 0
        %s314 = smul.addr %s313, 8
        %s315 = scalar_lea.vmem %s3, %s314
        %v316 = vld [vmem:[%s310] sm:$0x3]
        %v317 = vld [vmem:[%s260] sm:$0x3]
        %v318 = vunpack.c.l.bf16 %v316
        %v319 = vunpack.c.l.bf16 %v317
        %v320 = vmul.f32 %v318, 0.100097656
        %v321 = vmul.f32 %v319, 0.100097656
        %v322 = vpack.c.bf16 %v321, %v320
        %v323 = vunpack.c.l.bf16 %v322
        %v324 = vunpack.c.h.bf16 %v322
        %v325 = vmax.f32 %v318, %v323
        %v326 = vmax.f32 %v319, %v324
        %v327 = vpack.c.bf16 %v326, %v325
        %v328 = vld [vmem:[#allocation5] sm:$0xf]
        %v329 = vunpack.c.l.bf16 %v328
        %v330 = vunpack.c.l.bf16 %v327
        %332 = vset.pattern.permute.xlu0 0
        %333 = vperm.xlu0 %332, %v329
        %v334 = vpop.permute.xlu0 %333
        %v336 = vperm.slane %v330, 0
        %v337 = vmul.f32 %v334, %v336
        %v338 = vadd.f32 %v337, 0.0
        %339 = vset.pattern.permute.xlu0 1
        %340 = vperm.xlu0 %339, %v329
        %v341 = vpop.permute.xlu0 %340
        %v343 = vperm.slane %v330, 1
        %v344 = vmul.f32 %v341, %v343
        %v345 = vadd.f32 %v338, %v344
        %346 = vset.pattern.permute.xlu0 2
        %347 = vperm.xlu0 %346, %v329
        %v348 = vpop.permute.xlu0 %347
        %v350 = vperm.slane %v330, 2
        %v351 = vmul.f32 %v348, %v350
        %v352 = vadd.f32 %v345, %v351
        %353 = vset.pattern.permute.xlu0 3
        %354 = vperm.xlu0 %353, %v329
        %v355 = vpop.permute.xlu0 %354
        %v357 = vperm.slane %v330, 3
        %v358 = vmul.f32 %v355, %v357
        %v359 = vadd.f32 %v352, %v358
        %v360 = vunpack.c.h.bf16 %v327
        %361 = vset.pattern.permute.xlu0 4
        %362 = vperm.xlu0 %361, %v329
        %v363 = vpop.permute.xlu0 %362
        %v365 = vperm.slane %v360, 0
        %v366 = vmul.f32 %v363, %v336
        %v367 = vmul.f32 %v363, %v365
        %370 = vrot.lane.b32.xlu0 %v366, 126
        %v371 = vpop.permute.xlu0 %370
        %372 = vrot.lane.b32.xlu0 %v367, 126
        %v373 = vpop.permute.xlu0 %372
        %vm374 = vcmask 1031168
        %v375 = vsel %vm374, %v371, %v373
        %v377 = vadd.f32 %v359, %v375
        %378 = vset.pattern.permute.xlu0 5
        %379 = vperm.xlu0 %378, %v329
        %v380 = vpop.permute.xlu0 %379
        %v382 = vperm.slane %v360, 1
        %v383 = vmul.f32 %v380, %v343
        %v384 = vmul.f32 %v380, %v382
        %387 = vrot.lane.b32.xlu0 %v383, 126
        %v388 = vpop.permute.xlu0 %387
        %389 = vrot.lane.b32.xlu0 %v384, 126
        %v390 = vpop.permute.xlu0 %389
        %v391 = vsel %vm374, %v388, %v390
        %v393 = vadd.f32 %v377, %v391
        %394 = vset.pattern.permute.xlu0 6
        %395 = vperm.xlu0 %394, %v329
        %v396 = vpop.permute.xlu0 %395
        %v398 = vperm.slane %v360, 2
        %v399 = vmul.f32 %v396, %v350
        %v400 = vmul.f32 %v396, %v398
        %403 = vrot.lane.b32.xlu0 %v399, 126
        %v404 = vpop.permute.xlu0 %403
        %405 = vrot.lane.b32.xlu0 %v400, 126
        %v406 = vpop.permute.xlu0 %405
        %v407 = vsel %vm374, %v404, %v406
        %v409 = vadd.f32 %v393, %v407
        %410 = vset.pattern.permute.xlu0 7
        %411 = vperm.xlu0 %410, %v329
        %v412 = vpop.permute.xlu0 %411
        %v414 = vperm.slane %v360, 3
        %v415 = vmul.f32 %v412, %v357
        %v416 = vmul.f32 %v412, %v414
        %419 = vrot.lane.b32.xlu0 %v415, 126
        %v420 = vpop.permute.xlu0 %419
        %421 = vrot.lane.b32.xlu0 %v416, 126
        %v422 = vpop.permute.xlu0 %421
        %v423 = vsel %vm374, %v420, %v422
        %v425 = vadd.f32 %v409, %v423
        %426 = vset.pattern.permute.xlu0 8
        %427 = vperm.xlu0 %426, %v329
        %v428 = vpop.permute.xlu0 %427
        %v430 = vmul.f32 %v428, %v336
        %v431 = vmul.f32 %v428, %v365
        %434 = vrot.lane.b32.xlu0 %v430, 124
        %v435 = vpop.permute.xlu0 %434
        %436 = vrot.lane.b32.xlu0 %v431, 124
        %v437 = vpop.permute.xlu0 %436
        %vm438 = vcmask 1014784
        %v439 = vsel %vm438, %v435, %v437
        %v441 = vadd.f32 %v425, %v439
        %442 = vset.pattern.permute.xlu0 9
        %443 = vperm.xlu0 %442, %v329
        %v444 = vpop.permute.xlu0 %443
        %v446 = vmul.f32 %v444, %v343
        %v447 = vmul.f32 %v444, %v382
        %450 = vrot.lane.b32.xlu0 %v446, 124
        %v451 = vpop.permute.xlu0 %450
        %452 = vrot.lane.b32.xlu0 %v447, 124
        %v453 = vpop.permute.xlu0 %452
        %v454 = vsel %vm438, %v451, %v453
        %v456 = vadd.f32 %v441, %v454
        %457 = vset.pattern.permute.xlu0 10
        %458 = vperm.xlu0 %457, %v329
        %v459 = vpop.permute.xlu0 %458
        %v461 = vmul.f32 %v459, %v350
        %v462 = vmul.f32 %v459, %v398
        %465 = vrot.lane.b32.xlu0 %v461, 124
        %v466 = vpop.permute.xlu0 %465
        %467 = vrot.lane.b32.xlu0 %v462, 124
        %v468 = vpop.permute.xlu0 %467
        %v469 = vsel %vm438, %v466, %v468
        %v471 = vadd.f32 %v456, %v469
        %472 = vset.pattern.permute.xlu0 11
        %473 = vperm.xlu0 %472, %v329
        %v474 = vpop.permute.xlu0 %473
        %v476 = vmul.f32 %v474, %v357
        %v477 = vmul.f32 %v474, %v414
        %480 = vrot.lane.b32.xlu0 %v476, 124
        %v481 = vpop.permute.xlu0 %480
        %482 = vrot.lane.b32.xlu0 %v477, 124
        %v483 = vpop.permute.xlu0 %482
        %v484 = vsel %vm438, %v481, %v483
        %v486 = vadd.f32 %v471, %v484
        %v487 = vld [vmem:[%s315] sm:$0xff]
        %489 = vset.pattern.permute.xlu0 0
        %490 = vperm.xlu0 %489, %v487
        %v491 = vpop.permute.xlu0 %490
        %v493 = vadd.f32 %v486, %v491
        %494 = vst [vmem:[%s302] sm:$0xff] %v493
        %s495 = sand.u32 %s163, 1
        %s496 = scalar_lea.sflag [#allocation4], %s495
        %s497 = sand.u32 %s163, 1
        %s498 = smul.addr %s497, 8
        %s499 = scalar_lea.vmem [#allocation7], %s498
        // Predicated region
        $region45: #{tpu_custom_call.1} parent=35 // pred_check
          %p500 = pneg %p173
        $region46: #{tpu_custom_call.1} parent=35 // pred_check_branch
          %502 = sbr.rel (%p500) target = $region48
        $region47: #{tpu_custom_call.1} parent=35 // pred_region
          %504 = vsyncadd %s496, 0
          %s505 = sadd.s32 %s29, %s28
          %s506 = sadd.s32 %s505, %s27
          %s507 = smul.addr %s506, 8
          %s508 = scalar_lea.hbm %s4, %s507
          %s510 = sshll.u32 %s499, 4
          %s511 = int_to_ptr.vmem [resolvable:$true] %s510
          %s512 = sshll.u32 %s508, 4
          %s513 = int_to_ptr.hbm [resolvable:$true] %s512
          %515 = dma.vmem_to_hbm [thread:$0]  %s511, 128, %s513, %s496
        $region48: #{tpu_custom_call.1} parent=35 // pred_fallthru
          _
      $region36: #{tpu_custom_call.1} parent=5 // pred_fallthru
        _
      %p516 = scmp.le.s32.totalorder 2, %s17
      // Predicated region
      $region49: #{tpu_custom_call.1} parent=5 // pred_check
        %p517 = pneg %p516
      $region50: #{tpu_custom_call.1} parent=5 // pred_check_branch
        %519 = sbr.rel (%p517) target = $region52
      $region51: #{tpu_custom_call.1} parent=5 // pred_region
        %s520 = ssub.s32 %s17, 2
        // Predicated region
        $region53: #{tpu_custom_call.1} parent=51 // pred_check
          %p521 = pneg %p179
        $region54: #{tpu_custom_call.1} parent=51 // pred_check_branch
          %523 = sbr.rel (%p521) target = $region56
        $region55: #{tpu_custom_call.1} parent=51 // pred_region
          %s524 = sand.u32 %s164, 1
          %s525 = scalar_lea.sflag [#allocation4], %s524
          %s526 = sand.u32 %s164, 1
          %s527 = smul.addr %s526, 8
          %s528 = scalar_lea.vmem [#allocation7], %s527
          %530 = dma.done %s525, 128
        $region56: #{tpu_custom_call.1} parent=51 // pred_fallthru
          _
      $region52: #{tpu_custom_call.1} parent=5 // pred_fallthru
        _
    $region6: #{tpu_custom_call.1} parent=1 // loop_footer
      %s21 = sadd.s32 1, %s17
    $region7: #{tpu_custom_call.1} parent=1 // loop_footer_branch
      %16 = sbr.rel target = $region3
    $region8: #{tpu_custom_call.1} parent=1 // loop_exit
      _
    %531 = vsyncpa [#allocation3], 1
    %s532 = scalar_lea.sflag [#allocation3], 1
    %533 = vsyncpa %s532, 1
    %534 = vsyncpa [#allocation6], 1
    %535 = vsyncpa [#allocation4], 1
    %s536 = scalar_lea.sflag [#allocation4], 1
    %537 = vsyncpa %s536, 1

</llo_original>
